<compile_context>
chip_gen: v6e
topology: v6e:2x2x1
jax: 0.10.0
libtpu: 0.0.40
codegen_flags: <defaults>
</compile_context>

<pallas_src>
import functools

import jax
import jax.numpy as jnp
from jax.experimental import pallas as pl
from jax.experimental.pallas import tpu as pltpu


WEIGHT_DTYPE = jnp.bfloat16   # feedback: halves dominant weight DMA; f32 accumulate kept


def _select_kernel(w_ref, v_ref, a_ref, ff_ref, b_ref, res_ref, *,
                   apply_bn: bool, bn_eps: float, batch: int, embed_dim: int):
    """res[p] = sigmoid(bias[p] + sum_{b,d} (w_v*BN(v))[b,d]*Wv[p,b,d]
                                          + (w_a*BN(a))[b,d]*Wa[p,b,d])."""
    v = v_ref[...].astype(jnp.float32)            # (B, D)
    a = a_ref[...].astype(jnp.float32)            # (B, D)

    if apply_bn:  # reference: only when cls_video.shape[0] > 1 (static at trace time)
        vm = jnp.mean(v, axis=0, keepdims=True)
        vv = jnp.mean((v - vm) ** 2, axis=0, keepdims=True)   # biased var (train-mode BN)
        v = (v - vm) * jax.lax.rsqrt(vv + bn_eps)
        am = jnp.mean(a, axis=0, keepdims=True)
        av = jnp.mean((a - am) ** 2, axis=0, keepdims=True)
        a = (a - am) * jax.lax.rsqrt(av + bn_eps)

    # Hoisted scalar gains (applied once, not on every partial product).
    v = v * w_ref[0]                              # cls_video_w (SMEM scalar)
    a = a * w_ref[1]                              # cls_audio_w (SMEM scalar)

    D = embed_dim
    P = res_ref.shape[0]

    # fusion_cls column order: [video b=0..B-1 (each D wide), then audio b=0..B-1].
    # Accumulate Y[p, d] = sum_rows x_row[d] * W[p, row*D + d] on the VPU
    # (sublane-broadcast of the (1, D) row over the P sublanes of the weight slice),
    # then a single lane reduce gives the logits. Weight stays lane-dense in VMEM.
    acc = jnp.zeros((P, D), jnp.float32)
    for m, x in enumerate((v, a)):
        for b in range(batch):                    # static tiny loop: 2*B VPU mul/adds
            col = (m * batch + b) * D             # 128-aligned (D = 768)
            w_chunk = ff_ref[:, col:col + D].astype(jnp.float32)   # (P, D)
            acc = acc + x[b:b + 1, :] * w_chunk

    logits = b_ref[...] + jnp.sum(acc, axis=-1, keepdims=True)     # (P, 1)
    res_ref[...] = jax.nn.sigmoid(logits)


@functools.partial(jax.jit, static_argnames=("embed_dim", "weight_dtype"))
def _select_device(cls_video, cls_audio, ff_weight, ff_bias, cls_video_w, cls_audio_w,
                   divisors, *, embed_dim, weight_dtype):
    B = cls_video.shape[0]
    D = embed_dim                                  # reference reshape hard-codes 768
    P = ff_bias.shape[0]

    v = cls_video.reshape(B, D).astype(jnp.float32)
    a = cls_audio.reshape(B, D).astype(jnp.float32)
    ffw = ff_weight.astype(weight_dtype)           # (P, 2*B*D): native layout, lane-dense K
    bias = ff_bias.reshape(P, 1).astype(jnp.float32)
    w_scalars = jnp.concatenate(
        [cls_video_w.reshape(1), cls_audio_w.reshape(1)]).astype(jnp.float32)   # (2,)

    kernel = functools.partial(_select_kernel, apply_bn=(B > 1), bn_eps=1e-5,
                               batch=B, embed_dim=D)

    res = pl.pallas_call(
        kernel,
        out_shape=jax.ShapeDtypeStruct((P, 1), jnp.float32),
        in_specs=[
            pl.BlockSpec(memory_space=pltpu.MemorySpace.SMEM),   # [w_v, w_a]
            pl.BlockSpec(memory_space=pltpu.MemorySpace.VMEM),   # cls_video (B, D)
            pl.BlockSpec(memory_space=pltpu.MemorySpace.VMEM),   # cls_audio (B, D)
            pl.BlockSpec(memory_space=pltpu.MemorySpace.VMEM),   # FF weight (P, 2*B*D)
            pl.BlockSpec(memory_space=pltpu.MemorySpace.VMEM),   # FF bias (P, 1)
        ],
        out_specs=pl.BlockSpec(memory_space=pltpu.MemorySpace.VMEM),
    )(w_scalars, v, a, ffw, bias)

    res = res.reshape(P)
    pre_num = jnp.sum((res >= 0.7).astype(jnp.int32))

    # On-device divisor selection (no mid-forward host sync + Python loop).
    safe = jnp.maximum(pre_num, 1)
    divides = (pre_num > 0) & (jnp.mod(embed_dim, safe) == 0)
    idx = jnp.minimum(jnp.searchsorted(divisors, pre_num, side="right"),
                      divisors.shape[0] - 1)
    # TODO(synk): reference raises ZeroDivisionError when pre_num == 0; here that case
    #             falls through to the smallest divisor (1) instead of crashing.
    num = jnp.where(divides, pre_num, divisors[idx]).astype(jnp.int32)
    return num, res, pre_num


def select_forward(cls_video, cls_audio, params):
    """Full forward. Single host sync at the very end; returns (num:int, res, pre_num:int)."""
    embed_dim = params["embed_dim"]
    divisors = jnp.array([i for i in range(1, embed_dim) if embed_dim % i == 0],
                         dtype=jnp.int32)          # sorted; static per embed_dim
    num, res, pre_num = _select_device(
        cls_video, cls_audio, params["ff_weight"], params["ff_bias"],
        params["cls_video_w"], params["cls_audio_w"], divisors,
        embed_dim=embed_dim, weight_dtype=WEIGHT_DTYPE)
    jax.block_until_ready((num, res, pre_num))
    return int(num), res, int(pre_num)


if __name__ == "__main__":
    # The reference reshape hard-codes 768, so embed_dim must be 768.
    B = 2
    EMBED_DIM = 768
    NUM_PATCHES = 16

    key = jax.random.PRNGKey(0)
    k_v, k_a, k_w = jax.random.split(key, 3)

    # cls tokens as produced by a ViT-style encoder: (B, 1, embed_dim)
    cls_video = jax.random.normal(k_v, (B, 1, EMBED_DIM), dtype=jnp.float32)
    cls_audio = jax.random.normal(k_a, (B, 1, EMBED_DIM), dtype=jnp.float32)

    # Deterministic parameter init (reference creates FF fresh each forward).
    fan_in = EMBED_DIM * B * 2
    ff_weight = 0.01 * jax.random.uniform(k_w, (NUM_PATCHES, fan_in),
                                          minval=-1.0, maxval=1.0, dtype=jnp.float32)
    ff_bias = jnp.linspace(-2.0, 2.0, NUM_PATCHES, dtype=jnp.float32)

    params = {
        "embed_dim": EMBED_DIM,
        "num_patches": NUM_PATCHES,
        "cls_video_w": jnp.ones((1,), jnp.float32),   # nn.Parameter(torch.ones(1))
        "cls_audio_w": jnp.ones((1,), jnp.float32),
        "ff_weight": ff_weight,
        "ff_bias": ff_bias,
    }

    num, res, pre_num = select_forward(cls_video, cls_audio, params)
    jax.block_until_ready(res)
    assert res.shape == (NUM_PATCHES,)
    assert isinstance(num, int) and num >= 1
    print("KERNEL_OK")
</pallas_src>

<mosaic_0001>
module attributes {stable_mosaic.version = 11 : i64} {
  func.func @_select_kernel(%arg0: memref<2xf32, #tpu.memory_space<smem>>, %arg1: memref<2x768xf32, #tpu.memory_space<vmem>>, %arg2: memref<2x768xf32, #tpu.memory_space<vmem>>, %arg3: memref<16x3072xbf16, #tpu.memory_space<vmem>>, %arg4: memref<16x1xf32, #tpu.memory_space<vmem>>, %arg5: memref<16x1xf32, #tpu.memory_space<vmem>>) attributes {dimension_semantics = [], scalar_prefetch = 0 : i64, scratch_operands = 0 : i64, tpu.core_type = #tpu.core_type<tc>} {
    %c0 = arith.constant 0 : index
    %c0_0 = arith.constant 0 : index
    %0 = vector.load %arg1[%c0, %c0_0] : memref<2x768xf32, #tpu.memory_space<vmem>>, vector<2x768xf32>
    %c0_1 = arith.constant 0 : index
    %c0_2 = arith.constant 0 : index
    %1 = vector.load %arg2[%c0_1, %c0_2] : memref<2x768xf32, #tpu.memory_space<vmem>>, vector<2x768xf32>
    %cst = arith.constant dense<0.000000e+00> : vector<768xf32>
    %2 = vector.multi_reduction <add>, %0, %cst [0] : vector<2x768xf32> to vector<768xf32>
    %3 = vector.shape_cast %2 : vector<768xf32> to vector<1x768xf32>
    %cst_3 = arith.constant 2.000000e+00 : f32
    %4 = vector.broadcast %cst_3 : f32 to vector<1x768xf32>
    %5 = arith.divf %3, %4 : vector<1x768xf32>
    %6 = vector.broadcast %5 : vector<1x768xf32> to vector<2x768xf32>
    %7 = arith.subf %0, %6 : vector<2x768xf32>
    %8 = arith.mulf %7, %7 : vector<2x768xf32>
    %cst_4 = arith.constant dense<0.000000e+00> : vector<768xf32>
    %9 = vector.multi_reduction <add>, %8, %cst_4 [0] : vector<2x768xf32> to vector<768xf32>
    %10 = vector.shape_cast %9 : vector<768xf32> to vector<1x768xf32>
    %cst_5 = arith.constant 2.000000e+00 : f32
    %11 = vector.broadcast %cst_5 : f32 to vector<1x768xf32>
    %12 = arith.divf %10, %11 : vector<1x768xf32>
    %13 = vector.broadcast %5 : vector<1x768xf32> to vector<2x768xf32>
    %14 = arith.subf %0, %13 : vector<2x768xf32>
    %cst_6 = arith.constant 9.99999974E-6 : f32
    %15 = vector.broadcast %cst_6 : f32 to vector<1x768xf32>
    %16 = arith.addf %12, %15 : vector<1x768xf32>
    %17 = math.rsqrt %16 : vector<1x768xf32>
    %18 = vector.broadcast %17 : vector<1x768xf32> to vector<2x768xf32>
    %19 = arith.mulf %14, %18 : vector<2x768xf32>
    %cst_7 = arith.constant dense<0.000000e+00> : vector<768xf32>
    %20 = vector.multi_reduction <add>, %1, %cst_7 [0] : vector<2x768xf32> to vector<768xf32>
    %21 = vector.shape_cast %20 : vector<768xf32> to vector<1x768xf32>
    %cst_8 = arith.constant 2.000000e+00 : f32
    %22 = vector.broadcast %cst_8 : f32 to vector<1x768xf32>
    %23 = arith.divf %21, %22 : vector<1x768xf32>
    %24 = vector.broadcast %23 : vector<1x768xf32> to vector<2x768xf32>
    %25 = arith.subf %1, %24 : vector<2x768xf32>
    %26 = arith.mulf %25, %25 : vector<2x768xf32>
    %cst_9 = arith.constant dense<0.000000e+00> : vector<768xf32>
    %27 = vector.multi_reduction <add>, %26, %cst_9 [0] : vector<2x768xf32> to vector<768xf32>
    %28 = vector.shape_cast %27 : vector<768xf32> to vector<1x768xf32>
    %cst_10 = arith.constant 2.000000e+00 : f32
    %29 = vector.broadcast %cst_10 : f32 to vector<1x768xf32>
    %30 = arith.divf %28, %29 : vector<1x768xf32>
    %31 = vector.broadcast %23 : vector<1x768xf32> to vector<2x768xf32>
    %32 = arith.subf %1, %31 : vector<2x768xf32>
    %cst_11 = arith.constant 9.99999974E-6 : f32
    %33 = vector.broadcast %cst_11 : f32 to vector<1x768xf32>
    %34 = arith.addf %30, %33 : vector<1x768xf32>
    %35 = math.rsqrt %34 : vector<1x768xf32>
    %36 = vector.broadcast %35 : vector<1x768xf32> to vector<2x768xf32>
    %37 = arith.mulf %32, %36 : vector<2x768xf32>
    %c0_12 = arith.constant 0 : index
    %38 = memref.load %arg0[%c0_12] : memref<2xf32, #tpu.memory_space<smem>>
    %39 = vector.broadcast %38 : f32 to vector<2x768xf32>
    %40 = arith.mulf %19, %39 : vector<2x768xf32>
    %c1 = arith.constant 1 : index
    %41 = memref.load %arg0[%c1] : memref<2xf32, #tpu.memory_space<smem>>
    %42 = vector.broadcast %41 : f32 to vector<2x768xf32>
    %43 = arith.mulf %37, %42 : vector<2x768xf32>
    %cst_13 = arith.constant 0.000000e+00 : f32
    %44 = vector.broadcast %cst_13 : f32 to vector<16x768xf32>
    %c0_14 = arith.constant 0 : index
    %c0_15 = arith.constant 0 : index
    %45 = vector.load %arg3[%c0_14, %c0_15] : memref<16x3072xbf16, #tpu.memory_space<vmem>>, vector<16x768xbf16>
    %46 = arith.extf %45 : vector<16x768xbf16> to vector<16x768xf32>
    %47 = vector.extract_strided_slice %40 {offsets = [0, 0], sizes = [1, 768], strides = [1, 1]} : vector<2x768xf32> to vector<1x768xf32>
    %48 = vector.broadcast %47 : vector<1x768xf32> to vector<16x768xf32>
    %49 = arith.mulf %48, %46 : vector<16x768xf32>
    %50 = arith.addf %44, %49 : vector<16x768xf32>
    %c0_16 = arith.constant 0 : index
    %c768 = arith.constant 768 : index
    %51 = vector.load %arg3[%c0_16, %c768] : memref<16x3072xbf16, #tpu.memory_space<vmem>>, vector<16x768xbf16>
    %52 = arith.extf %51 : vector<16x768xbf16> to vector<16x768xf32>
    %53 = vector.extract_strided_slice %40 {offsets = [1, 0], sizes = [1, 768], strides = [1, 1]} : vector<2x768xf32> to vector<1x768xf32>
    %54 = vector.broadcast %53 : vector<1x768xf32> to vector<16x768xf32>
    %55 = arith.mulf %54, %52 : vector<16x768xf32>
    %56 = arith.addf %50, %55 : vector<16x768xf32>
    %c0_17 = arith.constant 0 : index
    %c1536 = arith.constant 1536 : index
    %57 = vector.load %arg3[%c0_17, %c1536] : memref<16x3072xbf16, #tpu.memory_space<vmem>>, vector<16x768xbf16>
    %58 = arith.extf %57 : vector<16x768xbf16> to vector<16x768xf32>
    %59 = vector.extract_strided_slice %43 {offsets = [0, 0], sizes = [1, 768], strides = [1, 1]} : vector<2x768xf32> to vector<1x768xf32>
    %60 = vector.broadcast %59 : vector<1x768xf32> to vector<16x768xf32>
    %61 = arith.mulf %60, %58 : vector<16x768xf32>
    %62 = arith.addf %56, %61 : vector<16x768xf32>
    %c0_18 = arith.constant 0 : index
    %c2304 = arith.constant 2304 : index
    %63 = vector.load %arg3[%c0_18, %c2304] : memref<16x3072xbf16, #tpu.memory_space<vmem>>, vector<16x768xbf16>
    %64 = arith.extf %63 : vector<16x768xbf16> to vector<16x768xf32>
    %65 = vector.extract_strided_slice %43 {offsets = [1, 0], sizes = [1, 768], strides = [1, 1]} : vector<2x768xf32> to vector<1x768xf32>
    %66 = vector.broadcast %65 : vector<1x768xf32> to vector<16x768xf32>
    %67 = arith.mulf %66, %64 : vector<16x768xf32>
    %68 = arith.addf %62, %67 : vector<16x768xf32>
    %c0_19 = arith.constant 0 : index
    %c0_20 = arith.constant 0 : index
    %69 = vector.load %arg4[%c0_19, %c0_20] : memref<16x1xf32, #tpu.memory_space<vmem>>, vector<16x1xf32>
    %cst_21 = arith.constant dense<0.000000e+00> : vector<16xf32>
    %70 = vector.multi_reduction <add>, %68, %cst_21 [1] : vector<16x768xf32> to vector<16xf32>
    %71 = vector.shape_cast %70 : vector<16xf32> to vector<16x1xf32>
    %72 = arith.addf %69, %71 : vector<16x1xf32>
    %73 = arith.negf %72 : vector<16x1xf32>
    %74 = math.exp %73 : vector<16x1xf32>
    %cst_22 = arith.constant 1.000000e+00 : f32
    %75 = vector.broadcast %cst_22 : f32 to vector<16x1xf32>
    %76 = arith.addf %75, %74 : vector<16x1xf32>
    %77 = arith.divf %75, %76 : vector<16x1xf32>
    %c0_23 = arith.constant 0 : index
    %c0_24 = arith.constant 0 : index
    %78 = vector.load %arg5[%c0_23, %c0_24] : memref<16x1xf32, #tpu.memory_space<vmem>>, vector<16x1xf32>
    tpu.vector_store %arg5[%c0_23, %c0_24], %77 {strides = array<i32>} : memref<16x1xf32, #tpu.memory_space<vmem>>, vector<16x1xf32>,
    return
  }
}

</mosaic_0001>

<llo_original>
// kernel: _select_device.1
$region0: #{_select_device.1}
  #allocation0 [shape = 'u32[]', space=smem, size = 0x4, offset = 0x4, fixed_abs, tag = 'smem constant byte address 0x4 - core index']
  #allocation1 [shape = 'u32[144,128]{1,0:T(1,128)}', space=vmem, size = 0x12000, scoped, tag = 'internal scratch']
  %s0 = inlined_call_operand.vmem [shape: f32[2], index: 0, kind: input, shape index: {}]
  %s1 = inlined_call_operand.vmem [shape: f32[2,768], index: 1, kind: input, shape index: {}]
  %s2 = inlined_call_operand.vmem [shape: f32[2,768], index: 2, kind: input, shape index: {}]
  %s3 = inlined_call_operand.vmem [shape: bf16[16,3072], index: 3, kind: input, shape index: {}]
  %s4 = inlined_call_operand.vmem [shape: f32[16,1], index: 4, kind: input, shape index: {}]
  %s5 = inlined_call_operand.vmem [shape: f32[16,1], index: 5, kind: output, shape index: {}]
  %s6 = sld [smem:[#allocation0]]
  $region34: #{_select_device.1} parent=0
    _
  %s8 = ssub.s32 1, %s6
  %s9 = scalar_select 0, %s8, %s6
  $region1: #{_select_device.1} parent=0
    #allocation2 [shape = 'u8[512]{0}', space=smem, size = 0x200, scoped, tag = 'input window, operand 0, single buffered']
    #allocation3 [shape = 's32[1]{0}', space=sflag, size = 0x4, scoped, tag = 'scoped memory for _select_device.1']
    %10 = vsyncpa [#allocation3], 0
    // Predicated region
    $region2: #{_select_device.1} parent=1 // pred_check
      _
    $region3: #{_select_device.1} parent=1 // pred_check_branch
      %12 = sbr.rel (0) target = $region5
    $region4: #{_select_device.1} parent=1 // pred_region
      %s14 = ssub.s32 16, 16
      %15 = vsyncadd [#allocation3], %s14
      %s17 = sshll.u32 %s0, 4
      %s18 = int_to_ptr.vmem [resolvable:$true] %s17
      %20 = dma.vmem_to_smem %s18, 16, [#allocation2], [#allocation3]
    $region5: #{_select_device.1} parent=1 // pred_fallthru
      _
    // Predicated region
    $region6: #{_select_device.1} parent=1 // pred_check
      _
    $region7: #{_select_device.1} parent=1 // pred_check_branch
      %22 = sbr.rel (0) target = $region9
    $region8: #{_select_device.1} parent=1 // pred_region
      _
    $region9: #{_select_device.1} parent=1 // pred_fallthru
      _
    // Predicated region
    $region10: #{_select_device.1} parent=1 // pred_check
      _
    $region11: #{_select_device.1} parent=1 // pred_check_branch
      %24 = sbr.rel (0) target = $region13
    $region12: #{_select_device.1} parent=1 // pred_region
      _
    $region13: #{_select_device.1} parent=1 // pred_fallthru
      _
    // Predicated region
    $region14: #{_select_device.1} parent=1 // pred_check
      _
    $region15: #{_select_device.1} parent=1 // pred_check_branch
      %26 = sbr.rel (0) target = $region17
    $region16: #{_select_device.1} parent=1 // pred_region
      _
    $region17: #{_select_device.1} parent=1 // pred_fallthru
      _
    // Predicated region
    $region18: #{_select_device.1} parent=1 // pred_check
      _
    $region19: #{_select_device.1} parent=1 // pred_check_branch
      %28 = sbr.rel (0) target = $region21
    $region20: #{_select_device.1} parent=1 // pred_region
      _
    $region21: #{_select_device.1} parent=1 // pred_fallthru
      _
    // Predicated region
    $region22: #{_select_device.1} parent=1 // pred_check
      _
    $region23: #{_select_device.1} parent=1 // pred_check_branch
      %30 = sbr.rel (0) target = $region25
    $region24: #{_select_device.1} parent=1 // pred_region
      %31 = dma.done [#allocation3], 16
    $region25: #{_select_device.1} parent=1 // pred_fallthru
      _
    %32 = sfence
    %v33 = vld [vmem:[%s1] sm:$0xff]
    %v34 = vld [vmem:[%s1 + $0x8] sm:$0xf]
    %v35 = vld [vmem:[%s2] sm:$0xff]
    %v36 = vld [vmem:[%s2 + $0x8] sm:$0xf]
    %v39 = vcombine.high %v33, %v33
    %v41 = vunpack.c.l.s4 1983009808
    %v42 = vunpack.c.0.s8 %v41
    %v43 = vlaneseq
    %v44 = vshrl.u32 %v43, 7
    %v45 = vsub.s32 %v42, %v44
    %v46 = vrot.slane %v33, %v45
    %v48 = vunpack.c.l.s4 1983009808
    %v49 = vunpack.c.0.s8 %v48
    %v50 = vlaneseq
    %v51 = vshrl.u32 %v50, 7
    %v52 = vsub.s32 %v49, %v51
    %v53 = vrot.slane %v39, %v52
    %v54 = vcombine.high %v46, %v46
    %v55 = vcombine.high %v53, %v53
    %v57 = vunpack.c.l.s4 1983009808
    %v58 = vunpack.c.0.s8 %v57
    %v59 = vlaneseq
    %v60 = vshrl.u32 %v59, 7
    %v61 = vsub.s32 %v58, %v60
    %v62 = vrot.slane %v34, %v61
    %v63 = vcombine.high %v62, %v62
    %vm70 = vcmask 1041408
    %v71 = vsel %vm70, %v46, 0.0
    %v72 = vrot.slane %v71, 4
    %v73 = vadd.f32 %v71, %v72
    %v74 = vrot.slane %v73, 2
    %v75 = vadd.f32 %v73, %v74
    %v76 = vrot.slane %v75, 1
    %v77 = vadd.f32 %v75, %v76
    %v78 = vsel %vm70, %v54, 0.0
    %v79 = vrot.slane %v78, 4
    %v80 = vadd.f32 %v78, %v79
    %v81 = vrot.slane %v80, 2
    %v82 = vadd.f32 %v80, %v81
    %v83 = vrot.slane %v82, 1
    %v84 = vadd.f32 %v82, %v83
    %v85 = vsel %vm70, %v53, 0.0
    %v86 = vrot.slane %v85, 4
    %v87 = vadd.f32 %v85, %v86
    %v88 = vrot.slane %v87, 2
    %v89 = vadd.f32 %v87, %v88
    %v90 = vrot.slane %v89, 1
    %v91 = vadd.f32 %v89, %v90
    %v92 = vsel %vm70, %v55, 0.0
    %v93 = vrot.slane %v92, 4
    %v94 = vadd.f32 %v92, %v93
    %v95 = vrot.slane %v94, 2
    %v96 = vadd.f32 %v94, %v95
    %v97 = vrot.slane %v96, 1
    %v98 = vadd.f32 %v96, %v97
    %v99 = vsel %vm70, %v62, 0.0
    %v100 = vrot.slane %v99, 4
    %v101 = vadd.f32 %v99, %v100
    %v102 = vrot.slane %v101, 2
    %v103 = vadd.f32 %v101, %v102
    %v104 = vrot.slane %v103, 1
    %v105 = vadd.f32 %v103, %v104
    %v106 = vsel %vm70, %v63, 0.0
    %v107 = vrot.slane %v106, 4
    %v108 = vadd.f32 %v106, %v107
    %v109 = vrot.slane %v108, 2
    %v110 = vadd.f32 %v108, %v109
    %v111 = vrot.slane %v110, 1
    %v112 = vadd.f32 %v110, %v111
    %v113 = vrcp.pop 2.0
    %v114 = vmul.f32 %v77, %v113
    %v115 = vmul.f32 %v84, %v113
    %v116 = vmul.f32 %v91, %v113
    %v117 = vmul.f32 %v98, %v113
    %v118 = vmul.f32 %v105, %v113
    %v119 = vmul.f32 %v112, %v113
    %v126 = vcombine.low %v114, %v115
    %v127 = vcombine.low %v116, %v117
    %v129 = vunpack.c.l.s4 1983009808
    %v130 = vunpack.c.0.s8 %v129
    %v131 = vlaneseq
    %v132 = vshrl.u32 %v131, 7
    %v133 = vsub.s32 %v130, %v132
    %v134 = vrot.slane %v126, %v133
    %v136 = vunpack.c.l.s4 1983009808
    %v137 = vunpack.c.0.s8 %v136
    %v138 = vlaneseq
    %v139 = vshrl.u32 %v138, 7
    %v140 = vsub.s32 %v137, %v139
    %v141 = vrot.slane %v127, %v140
    %v142 = vcombine.low %v134, %v141
    %v143 = vcombine.low %v118, %v119
    %v145 = vunpack.c.l.s4 1983009808
    %v146 = vunpack.c.0.s8 %v145
    %v147 = vlaneseq
    %v148 = vshrl.u32 %v147, 7
    %v149 = vsub.s32 %v146, %v148
    %v150 = vrot.slane %v143, %v149
    %v153 = vsub.f32 %v33, %v142
    %v154 = vsub.f32 %v34, %v150
    %v155 = vmul.f32 %v153, %v153
    %v156 = vmul.f32 %v154, %v154
    %v159 = vcombine.high %v155, %v155
    %v161 = vunpack.c.l.s4 1983009808
    %v162 = vunpack.c.0.s8 %v161
    %v163 = vlaneseq
    %v164 = vshrl.u32 %v163, 7
    %v165 = vsub.s32 %v162, %v164
    %v166 = vrot.slane %v155, %v165
    %v168 = vunpack.c.l.s4 1983009808
    %v169 = vunpack.c.0.s8 %v168
    %v170 = vlaneseq
    %v171 = vshrl.u32 %v170, 7
    %v172 = vsub.s32 %v169, %v171
    %v173 = vrot.slane %v159, %v172
    %v174 = vcombine.high %v166, %v166
    %v175 = vcombine.high %v173, %v173
    %v177 = vunpack.c.l.s4 1983009808
    %v178 = vunpack.c.0.s8 %v177
    %v179 = vlaneseq
    %v180 = vshrl.u32 %v179, 7
    %v181 = vsub.s32 %v178, %v180
    %v182 = vrot.slane %v156, %v181
    %v183 = vcombine.high %v182, %v182
    %v190 = vsel %vm70, %v166, 0.0
    %v191 = vrot.slane %v190, 4
    %v192 = vadd.f32 %v190, %v191
    %v193 = vrot.slane %v192, 2
    %v194 = vadd.f32 %v192, %v193
    %v195 = vrot.slane %v194, 1
    %v196 = vadd.f32 %v194, %v195
    %v197 = vsel %vm70, %v174, 0.0
    %v198 = vrot.slane %v197, 4
    %v199 = vadd.f32 %v197, %v198
    %v200 = vrot.slane %v199, 2
    %v201 = vadd.f32 %v199, %v200
    %v202 = vrot.slane %v201, 1
    %v203 = vadd.f32 %v201, %v202
    %v204 = vsel %vm70, %v173, 0.0
    %v205 = vrot.slane %v204, 4
    %v206 = vadd.f32 %v204, %v205
    %v207 = vrot.slane %v206, 2
    %v208 = vadd.f32 %v206, %v207
    %v209 = vrot.slane %v208, 1
    %v210 = vadd.f32 %v208, %v209
    %v211 = vsel %vm70, %v175, 0.0
    %v212 = vrot.slane %v211, 4
    %v213 = vadd.f32 %v211, %v212
    %v214 = vrot.slane %v213, 2
    %v215 = vadd.f32 %v213, %v214
    %v216 = vrot.slane %v215, 1
    %v217 = vadd.f32 %v215, %v216
    %v218 = vsel %vm70, %v182, 0.0
    %v219 = vrot.slane %v218, 4
    %v220 = vadd.f32 %v218, %v219
    %v221 = vrot.slane %v220, 2
    %v222 = vadd.f32 %v220, %v221
    %v223 = vrot.slane %v222, 1
    %v224 = vadd.f32 %v222, %v223
    %v225 = vsel %vm70, %v183, 0.0
    %v226 = vrot.slane %v225, 4
    %v227 = vadd.f32 %v225, %v226
    %v228 = vrot.slane %v227, 2
    %v229 = vadd.f32 %v227, %v228
    %v230 = vrot.slane %v229, 1
    %v231 = vadd.f32 %v229, %v230
    %v232 = vmul.f32 %v196, %v113
    %v233 = vmul.f32 %v203, %v113
    %v234 = vmul.f32 %v210, %v113
    %v235 = vmul.f32 %v217, %v113
    %v236 = vmul.f32 %v224, %v113
    %v237 = vmul.f32 %v231, %v113
    %v238 = vadd.f32 %v232, 1e-05
    %v239 = vadd.f32 %v233, 1e-05
    %v240 = vadd.f32 %v234, 1e-05
    %v241 = vadd.f32 %v235, 1e-05
    %v242 = vadd.f32 %v236, 1e-05
    %v243 = vadd.f32 %v237, 1e-05
    %v244 = vrsqrt.pop %v238
    %v245 = vrsqrt.pop %v239
    %v246 = vrsqrt.pop %v240
    %v247 = vrsqrt.pop %v241
    %v248 = vrsqrt.pop %v242
    %v249 = vrsqrt.pop %v243
    %v256 = vcombine.low %v244, %v245
    %v257 = vcombine.low %v246, %v247
    %v259 = vunpack.c.l.s4 1983009808
    %v260 = vunpack.c.0.s8 %v259
    %v261 = vlaneseq
    %v262 = vshrl.u32 %v261, 7
    %v263 = vsub.s32 %v260, %v262
    %v264 = vrot.slane %v256, %v263
    %v266 = vunpack.c.l.s4 1983009808
    %v267 = vunpack.c.0.s8 %v266
    %v268 = vlaneseq
    %v269 = vshrl.u32 %v268, 7
    %v270 = vsub.s32 %v267, %v269
    %v271 = vrot.slane %v257, %v270
    %v272 = vcombine.low %v264, %v271
    %v273 = vcombine.low %v248, %v249
    %v275 = vunpack.c.l.s4 1983009808
    %v276 = vunpack.c.0.s8 %v275
    %v277 = vlaneseq
    %v278 = vshrl.u32 %v277, 7
    %v279 = vsub.s32 %v276, %v278
    %v280 = vrot.slane %v273, %v279
    %v283 = vmul.f32 %v153, %v272
    %v284 = vmul.f32 %v154, %v280
    %v287 = vcombine.high %v35, %v35
    %v289 = vunpack.c.l.s4 1983009808
    %v290 = vunpack.c.0.s8 %v289
    %v291 = vlaneseq
    %v292 = vshrl.u32 %v291, 7
    %v293 = vsub.s32 %v290, %v292
    %v294 = vrot.slane %v35, %v293
    %v296 = vunpack.c.l.s4 1983009808
    %v297 = vunpack.c.0.s8 %v296
    %v298 = vlaneseq
    %v299 = vshrl.u32 %v298, 7
    %v300 = vsub.s32 %v297, %v299
    %v301 = vrot.slane %v287, %v300
    %v302 = vcombine.high %v294, %v294
    %v303 = vcombine.high %v301, %v301
    %v305 = vunpack.c.l.s4 1983009808
    %v306 = vunpack.c.0.s8 %v305
    %v307 = vlaneseq
    %v308 = vshrl.u32 %v307, 7
    %v309 = vsub.s32 %v306, %v308
    %v310 = vrot.slane %v36, %v309
    %v311 = vcombine.high %v310, %v310
    %v318 = vsel %vm70, %v294, 0.0
    %v319 = vrot.slane %v318, 4
    %v320 = vadd.f32 %v318, %v319
    %v321 = vrot.slane %v320, 2
    %v322 = vadd.f32 %v320, %v321
    %v323 = vrot.slane %v322, 1
    %v324 = vadd.f32 %v322, %v323
    %v325 = vsel %vm70, %v302, 0.0
    %v326 = vrot.slane %v325, 4
    %v327 = vadd.f32 %v325, %v326
    %v328 = vrot.slane %v327, 2
    %v329 = vadd.f32 %v327, %v328
    %v330 = vrot.slane %v329, 1
    %v331 = vadd.f32 %v329, %v330
    %v332 = vsel %vm70, %v301, 0.0
    %v333 = vrot.slane %v332, 4
    %v334 = vadd.f32 %v332, %v333
    %v335 = vrot.slane %v334, 2
    %v336 = vadd.f32 %v334, %v335
    %v337 = vrot.slane %v336, 1
    %v338 = vadd.f32 %v336, %v337
    %v339 = vsel %vm70, %v303, 0.0
    %v340 = vrot.slane %v339, 4
    %v341 = vadd.f32 %v339, %v340
    %v342 = vrot.slane %v341, 2
    %v343 = vadd.f32 %v341, %v342
    %v344 = vrot.slane %v343, 1
    %v345 = vadd.f32 %v343, %v344
    %v346 = vsel %vm70, %v310, 0.0
    %v347 = vrot.slane %v346, 4
    %v348 = vadd.f32 %v346, %v347
    %v349 = vrot.slane %v348, 2
    %v350 = vadd.f32 %v348, %v349
    %v351 = vrot.slane %v350, 1
    %v352 = vadd.f32 %v350, %v351
    %v353 = vsel %vm70, %v311, 0.0
    %v354 = vrot.slane %v353, 4
    %v355 = vadd.f32 %v353, %v354
    %v356 = vrot.slane %v355, 2
    %v357 = vadd.f32 %v355, %v356
    %v358 = vrot.slane %v357, 1
    %v359 = vadd.f32 %v357, %v358
    %v360 = vmul.f32 %v324, %v113
    %v361 = vmul.f32 %v331, %v113
    %v362 = vmul.f32 %v338, %v113
    %v363 = vmul.f32 %v345, %v113
    %v364 = vmul.f32 %v352, %v113
    %v365 = vmul.f32 %v359, %v113
    %v372 = vcombine.low %v360, %v361
    %v373 = vcombine.low %v362, %v363
    %v375 = vunpack.c.l.s4 1983009808
    %v376 = vunpack.c.0.s8 %v375
    %v377 = vlaneseq
    %v378 = vshrl.u32 %v377, 7
    %v379 = vsub.s32 %v376, %v378
    %v380 = vrot.slane %v372, %v379
    %v382 = vunpack.c.l.s4 1983009808
    %v383 = vunpack.c.0.s8 %v382
    %v384 = vlaneseq
    %v385 = vshrl.u32 %v384, 7
    %v386 = vsub.s32 %v383, %v385
    %v387 = vrot.slane %v373, %v386
    %v388 = vcombine.low %v380, %v387
    %v389 = vcombine.low %v364, %v365
    %v391 = vunpack.c.l.s4 1983009808
    %v392 = vunpack.c.0.s8 %v391
    %v393 = vlaneseq
    %v394 = vshrl.u32 %v393, 7
    %v395 = vsub.s32 %v392, %v394
    %v396 = vrot.slane %v389, %v395
    %v399 = vsub.f32 %v35, %v388
    %v400 = vsub.f32 %v36, %v396
    %v401 = vmul.f32 %v399, %v399
    %v402 = vmul.f32 %v400, %v400
    %v405 = vcombine.high %v401, %v401
    %v407 = vunpack.c.l.s4 1983009808
    %v408 = vunpack.c.0.s8 %v407
    %v409 = vlaneseq
    %v410 = vshrl.u32 %v409, 7
    %v411 = vsub.s32 %v408, %v410
    %v412 = vrot.slane %v401, %v411
    %v414 = vunpack.c.l.s4 1983009808
    %v415 = vunpack.c.0.s8 %v414
    %v416 = vlaneseq
    %v417 = vshrl.u32 %v416, 7
    %v418 = vsub.s32 %v415, %v417
    %v419 = vrot.slane %v405, %v418
    %v420 = vcombine.high %v412, %v412
    %v421 = vcombine.high %v419, %v419
    %v423 = vunpack.c.l.s4 1983009808
    %v424 = vunpack.c.0.s8 %v423
    %v425 = vlaneseq
    %v426 = vshrl.u32 %v425, 7
    %v427 = vsub.s32 %v424, %v426
    %v428 = vrot.slane %v402, %v427
    %v429 = vcombine.high %v428, %v428
    %v436 = vsel %vm70, %v412, 0.0
    %v437 = vrot.slane %v436, 4
    %v438 = vadd.f32 %v436, %v437
    %v439 = vrot.slane %v438, 2
    %v440 = vadd.f32 %v438, %v439
    %v441 = vrot.slane %v440, 1
    %v442 = vadd.f32 %v440, %v441
    %v443 = vsel %vm70, %v420, 0.0
    %v444 = vrot.slane %v443, 4
    %v445 = vadd.f32 %v443, %v444
    %v446 = vrot.slane %v445, 2
    %v447 = vadd.f32 %v445, %v446
    %v448 = vrot.slane %v447, 1
    %v449 = vadd.f32 %v447, %v448
    %v450 = vsel %vm70, %v419, 0.0
    %v451 = vrot.slane %v450, 4
    %v452 = vadd.f32 %v450, %v451
    %v453 = vrot.slane %v452, 2
    %v454 = vadd.f32 %v452, %v453
    %v455 = vrot.slane %v454, 1
    %v456 = vadd.f32 %v454, %v455
    %v457 = vsel %vm70, %v421, 0.0
    %v458 = vrot.slane %v457, 4
    %v459 = vadd.f32 %v457, %v458
    %v460 = vrot.slane %v459, 2
    %v461 = vadd.f32 %v459, %v460
    %v462 = vrot.slane %v461, 1
    %v463 = vadd.f32 %v461, %v462
    %v464 = vsel %vm70, %v428, 0.0
    %v465 = vrot.slane %v464, 4
    %v466 = vadd.f32 %v464, %v465
    %v467 = vrot.slane %v466, 2
    %v468 = vadd.f32 %v466, %v467
    %v469 = vrot.slane %v468, 1
    %v470 = vadd.f32 %v468, %v469
    %v471 = vsel %vm70, %v429, 0.0
    %v472 = vrot.slane %v471, 4
    %v473 = vadd.f32 %v471, %v472
    %v474 = vrot.slane %v473, 2
    %v475 = vadd.f32 %v473, %v474
    %v476 = vrot.slane %v475, 1
    %v477 = vadd.f32 %v475, %v476
    %v478 = vmul.f32 %v442, %v113
    %v479 = vmul.f32 %v449, %v113
    %v480 = vmul.f32 %v456, %v113
    %v481 = vmul.f32 %v463, %v113
    %v482 = vmul.f32 %v470, %v113
    %v483 = vmul.f32 %v477, %v113
    %v484 = vadd.f32 %v478, 1e-05
    %v485 = vadd.f32 %v479, 1e-05
    %v486 = vadd.f32 %v480, 1e-05
    %v487 = vadd.f32 %v481, 1e-05
    %v488 = vadd.f32 %v482, 1e-05
    %v489 = vadd.f32 %v483, 1e-05
    %v490 = vrsqrt.pop %v484
    %v491 = vrsqrt.pop %v485
    %v492 = vrsqrt.pop %v486
    %v493 = vrsqrt.pop %v487
    %v494 = vrsqrt.pop %v488
    %v495 = vrsqrt.pop %v489
    %v502 = vcombine.low %v490, %v491
    %v503 = vcombine.low %v492, %v493
    %v505 = vunpack.c.l.s4 1983009808
    %v506 = vunpack.c.0.s8 %v505
    %v507 = vlaneseq
    %v508 = vshrl.u32 %v507, 7
    %v509 = vsub.s32 %v506, %v508
    %v510 = vrot.slane %v502, %v509
    %v512 = vunpack.c.l.s4 1983009808
    %v513 = vunpack.c.0.s8 %v512
    %v514 = vlaneseq
    %v515 = vshrl.u32 %v514, 7
    %v516 = vsub.s32 %v513, %v515
    %v517 = vrot.slane %v503, %v516
    %v518 = vcombine.low %v510, %v517
    %v519 = vcombine.low %v494, %v495
    %v521 = vunpack.c.l.s4 1983009808
    %v522 = vunpack.c.0.s8 %v521
    %v523 = vlaneseq
    %v524 = vshrl.u32 %v523, 7
    %v525 = vsub.s32 %v522, %v524
    %v526 = vrot.slane %v519, %v525
    %v529 = vmul.f32 %v399, %v518
    %v530 = vmul.f32 %v400, %v526
    %s531 = sld [smem:[#allocation2]]
    %v532 = vstv %s531
    %v533 = vmul.f32 %v283, %v532
    %v534 = vmul.f32 %v284, %v532
    %s535 = sld [smem:[#allocation2 + $0x1]]
    %v536 = vstv %s535
    %v537 = vmul.f32 %v529, %v536
    %v538 = vmul.f32 %v530, %v536
    %v539 = vld [vmem:[%s3] sm:$0xff]
    %v540 = vld [vmem:[%s3 + $0x8] sm:$0xff]
    %v541 = vld [vmem:[%s3 + $0x10] sm:$0xff]
    %v542 = vld [vmem:[%s3 + $0x60] sm:$0xff]
    %v543 = vld [vmem:[%s3 + $0x68] sm:$0xff]
    %v544 = vld [vmem:[%s3 + $0x70] sm:$0xff]
    %v545 = vunpack.c.l.bf16 %v539
    %v546 = vunpack.c.h.bf16 %v539
    %v547 = vunpack.c.l.bf16 %v540
    %v548 = vunpack.c.h.bf16 %v540
    %v549 = vunpack.c.l.bf16 %v541
    %v550 = vunpack.c.h.bf16 %v541
    %v551 = vunpack.c.l.bf16 %v542
    %v552 = vunpack.c.h.bf16 %v542
    %v553 = vunpack.c.l.bf16 %v543
    %v554 = vunpack.c.h.bf16 %v543
    %v555 = vunpack.c.l.bf16 %v544
    %v556 = vunpack.c.h.bf16 %v544
    %v559 = vlaneseq
    %v560 = vshrl.u32 %v559, 7
    %v561 = vsub.s32 0, %v560
    %v562 = vrot.slane %v533, %v561
    %v563 = vlaneseq
    %v564 = vshrl.u32 %v563, 7
    %v565 = vsub.s32 2, %v564
    %v566 = vrot.slane %v533, %v565
    %v567 = vlaneseq
    %v568 = vshrl.u32 %v567, 7
    %v569 = vsub.s32 4, %v568
    %v570 = vrot.slane %v533, %v569
    %v571 = vlaneseq
    %v572 = vshrl.u32 %v571, 7
    %v573 = vsub.s32 6, %v572
    %v574 = vrot.slane %v533, %v573
    %v575 = vlaneseq
    %v576 = vshrl.u32 %v575, 7
    %v577 = vsub.s32 0, %v576
    %v578 = vrot.slane %v534, %v577
    %v579 = vlaneseq
    %v580 = vshrl.u32 %v579, 7
    %v581 = vsub.s32 2, %v580
    %v582 = vrot.slane %v534, %v581
    %v589 = vlaneseq
    %v590 = vshrl.u32 %v589, 7
    %v591 = vsub.s32 0, %v590
    %v592 = vrot.slane %v562, %v591
    %v593 = vlaneseq
    %v594 = vshrl.u32 %v593, 7
    %v595 = vsub.s32 0, %v594
    %v596 = vrot.slane %v566, %v595
    %v597 = vlaneseq
    %v598 = vshrl.u32 %v597, 7
    %v599 = vsub.s32 0, %v598
    %v600 = vrot.slane %v570, %v599
    %v601 = vlaneseq
    %v602 = vshrl.u32 %v601, 7
    %v603 = vsub.s32 0, %v602
    %v604 = vrot.slane %v574, %v603
    %v605 = vlaneseq
    %v606 = vshrl.u32 %v605, 7
    %v607 = vsub.s32 0, %v606
    %v608 = vrot.slane %v578, %v607
    %v609 = vlaneseq
    %v610 = vshrl.u32 %v609, 7
    %v611 = vsub.s32 0, %v610
    %v612 = vrot.slane %v582, %v611
    %v613 = vmul.f32 %v592, %v545
    %v614 = vmul.f32 %v596, %v546
    %v615 = vmul.f32 %v600, %v547
    %v616 = vmul.f32 %v604, %v548
    %v617 = vmul.f32 %v608, %v549
    %v618 = vmul.f32 %v612, %v550
    %v619 = vmul.f32 %v592, %v551
    %v620 = vmul.f32 %v596, %v552
    %v621 = vmul.f32 %v600, %v553
    %v622 = vmul.f32 %v604, %v554
    %v623 = vmul.f32 %v608, %v555
    %v624 = vmul.f32 %v612, %v556
    %v625 = vadd.f32 %v613, 0.0
    %v626 = vadd.f32 %v614, 0.0
    %v627 = vadd.f32 %v615, 0.0
    %v628 = vadd.f32 %v616, 0.0
    %v629 = vadd.f32 %v617, 0.0
    %v630 = vadd.f32 %v618, 0.0
    %v631 = vadd.f32 %v619, 0.0
    %v632 = vadd.f32 %v620, 0.0
    %v633 = vadd.f32 %v621, 0.0
    %v634 = vadd.f32 %v622, 0.0
    %v635 = vadd.f32 %v623, 0.0
    %v636 = vadd.f32 %v624, 0.0
    %v637 = vld [vmem:[%s3 + $0x18] sm:$0xff]
    %v638 = vld [vmem:[%s3 + $0x20] sm:$0xff]
    %v639 = vld [vmem:[%s3 + $0x28] sm:$0xff]
    %v640 = vld [vmem:[%s3 + $0x78] sm:$0xff]
    %v641 = vld [vmem:[%s3 + $0x80] sm:$0xff]
    %v642 = vld [vmem:[%s3 + $0x88] sm:$0xff]
    %v643 = vunpack.c.l.bf16 %v637
    %v644 = vunpack.c.h.bf16 %v637
    %v645 = vunpack.c.l.bf16 %v638
    %v646 = vunpack.c.h.bf16 %v638
    %v647 = vunpack.c.l.bf16 %v639
    %v648 = vunpack.c.h.bf16 %v639
    %v649 = vunpack.c.l.bf16 %v640
    %v650 = vunpack.c.h.bf16 %v640
    %v651 = vunpack.c.l.bf16 %v641
    %v652 = vunpack.c.h.bf16 %v641
    %v653 = vunpack.c.l.bf16 %v642
    %v654 = vunpack.c.h.bf16 %v642
    %v655 = vlaneseq
    %v656 = vshrl.u32 %v655, 7
    %v657 = vsub.s32 1, %v656
    %v658 = vrot.slane %v533, %v657
    %v659 = vlaneseq
    %v660 = vshrl.u32 %v659, 7
    %v661 = vsub.s32 3, %v660
    %v662 = vrot.slane %v533, %v661
    %v663 = vlaneseq
    %v664 = vshrl.u32 %v663, 7
    %v665 = vsub.s32 5, %v664
    %v666 = vrot.slane %v533, %v665
    %v667 = vlaneseq
    %v668 = vshrl.u32 %v667, 7
    %v669 = vsub.s32 7, %v668
    %v670 = vrot.slane %v533, %v669
    %v671 = vlaneseq
    %v672 = vshrl.u32 %v671, 7
    %v673 = vsub.s32 1, %v672
    %v674 = vrot.slane %v534, %v673
    %v675 = vlaneseq
    %v676 = vshrl.u32 %v675, 7
    %v677 = vsub.s32 3, %v676
    %v678 = vrot.slane %v534, %v677
    %v685 = vlaneseq
    %v686 = vshrl.u32 %v685, 7
    %v687 = vsub.s32 1, %v686
    %v688 = vrot.slane %v658, %v687
    %v689 = vlaneseq
    %v690 = vshrl.u32 %v689, 7
    %v691 = vsub.s32 1, %v690
    %v692 = vrot.slane %v662, %v691
    %v693 = vlaneseq
    %v694 = vshrl.u32 %v693, 7
    %v695 = vsub.s32 1, %v694
    %v696 = vrot.slane %v666, %v695
    %v697 = vlaneseq
    %v698 = vshrl.u32 %v697, 7
    %v699 = vsub.s32 1, %v698
    %v700 = vrot.slane %v670, %v699
    %v701 = vlaneseq
    %v702 = vshrl.u32 %v701, 7
    %v703 = vsub.s32 1, %v702
    %v704 = vrot.slane %v674, %v703
    %v705 = vlaneseq
    %v706 = vshrl.u32 %v705, 7
    %v707 = vsub.s32 1, %v706
    %v708 = vrot.slane %v678, %v707
    %v709 = vmul.f32 %v688, %v643
    %v710 = vmul.f32 %v692, %v644
    %v711 = vmul.f32 %v696, %v645
    %v712 = vmul.f32 %v700, %v646
    %v713 = vmul.f32 %v704, %v647
    %v714 = vmul.f32 %v708, %v648
    %v715 = vmul.f32 %v688, %v649
    %v716 = vmul.f32 %v692, %v650
    %v717 = vmul.f32 %v696, %v651
    %v718 = vmul.f32 %v700, %v652
    %v719 = vmul.f32 %v704, %v653
    %v720 = vmul.f32 %v708, %v654
    %v721 = vadd.f32 %v625, %v709
    %v722 = vadd.f32 %v626, %v710
    %v723 = vadd.f32 %v627, %v711
    %v724 = vadd.f32 %v628, %v712
    %v725 = vadd.f32 %v629, %v713
    %v726 = vadd.f32 %v630, %v714
    %v727 = vadd.f32 %v631, %v715
    %v728 = vadd.f32 %v632, %v716
    %v729 = vadd.f32 %v633, %v717
    %v730 = vadd.f32 %v634, %v718
    %v731 = vadd.f32 %v635, %v719
    %v732 = vadd.f32 %v636, %v720
    %v733 = vld [vmem:[%s3 + $0x30] sm:$0xff]
    %v734 = vld [vmem:[%s3 + $0x38] sm:$0xff]
    %v735 = vld [vmem:[%s3 + $0x40] sm:$0xff]
    %v736 = vld [vmem:[%s3 + $0x90] sm:$0xff]
    %v737 = vld [vmem:[%s3 + $0x98] sm:$0xff]
    %v738 = vld [vmem:[%s3 + $0xa0] sm:$0xff]
    %v739 = vunpack.c.l.bf16 %v733
    %v740 = vunpack.c.h.bf16 %v733
    %v741 = vunpack.c.l.bf16 %v734
    %v742 = vunpack.c.h.bf16 %v734
    %v743 = vunpack.c.l.bf16 %v735
    %v744 = vunpack.c.h.bf16 %v735
    %v745 = vunpack.c.l.bf16 %v736
    %v746 = vunpack.c.h.bf16 %v736
    %v747 = vunpack.c.l.bf16 %v737
    %v748 = vunpack.c.h.bf16 %v737
    %v749 = vunpack.c.l.bf16 %v738
    %v750 = vunpack.c.h.bf16 %v738
    %v753 = vlaneseq
    %v754 = vshrl.u32 %v753, 7
    %v755 = vsub.s32 0, %v754
    %v756 = vrot.slane %v537, %v755
    %v757 = vlaneseq
    %v758 = vshrl.u32 %v757, 7
    %v759 = vsub.s32 2, %v758
    %v760 = vrot.slane %v537, %v759
    %v761 = vlaneseq
    %v762 = vshrl.u32 %v761, 7
    %v763 = vsub.s32 4, %v762
    %v764 = vrot.slane %v537, %v763
    %v765 = vlaneseq
    %v766 = vshrl.u32 %v765, 7
    %v767 = vsub.s32 6, %v766
    %v768 = vrot.slane %v537, %v767
    %v769 = vlaneseq
    %v770 = vshrl.u32 %v769, 7
    %v771 = vsub.s32 0, %v770
    %v772 = vrot.slane %v538, %v771
    %v773 = vlaneseq
    %v774 = vshrl.u32 %v773, 7
    %v775 = vsub.s32 2, %v774
    %v776 = vrot.slane %v538, %v775
    %v783 = vlaneseq
    %v784 = vshrl.u32 %v783, 7
    %v785 = vsub.s32 0, %v784
    %v786 = vrot.slane %v756, %v785
    %v787 = vlaneseq
    %v788 = vshrl.u32 %v787, 7
    %v789 = vsub.s32 0, %v788
    %v790 = vrot.slane %v760, %v789
    %v791 = vlaneseq
    %v792 = vshrl.u32 %v791, 7
    %v793 = vsub.s32 0, %v792
    %v794 = vrot.slane %v764, %v793
    %v795 = vlaneseq
    %v796 = vshrl.u32 %v795, 7
    %v797 = vsub.s32 0, %v796
    %v798 = vrot.slane %v768, %v797
    %v799 = vlaneseq
    %v800 = vshrl.u32 %v799, 7
    %v801 = vsub.s32 0, %v800
    %v802 = vrot.slane %v772, %v801
    %v803 = vlaneseq
    %v804 = vshrl.u32 %v803, 7
    %v805 = vsub.s32 0, %v804
    %v806 = vrot.slane %v776, %v805
    %v807 = vmul.f32 %v786, %v739
    %v808 = vmul.f32 %v790, %v740
    %v809 = vmul.f32 %v794, %v741
    %v810 = vmul.f32 %v798, %v742
    %v811 = vmul.f32 %v802, %v743
    %v812 = vmul.f32 %v806, %v744
    %v813 = vmul.f32 %v786, %v745
    %v814 = vmul.f32 %v790, %v746
    %v815 = vmul.f32 %v794, %v747
    %v816 = vmul.f32 %v798, %v748
    %v817 = vmul.f32 %v802, %v749
    %v818 = vmul.f32 %v806, %v750
    %v819 = vadd.f32 %v721, %v807
    %v820 = vadd.f32 %v722, %v808
    %v821 = vadd.f32 %v723, %v809
    %v822 = vadd.f32 %v724, %v810
    %v823 = vadd.f32 %v725, %v811
    %v824 = vadd.f32 %v726, %v812
    %v825 = vadd.f32 %v727, %v813
    %v826 = vadd.f32 %v728, %v814
    %v827 = vadd.f32 %v729, %v815
    %v828 = vadd.f32 %v730, %v816
    %v829 = vadd.f32 %v731, %v817
    %v830 = vadd.f32 %v732, %v818
    %v831 = vld [vmem:[%s3 + $0x48] sm:$0xff]
    %v832 = vld [vmem:[%s3 + $0x50] sm:$0xff]
    %v833 = vld [vmem:[%s3 + $0x58] sm:$0xff]
    %v834 = vld [vmem:[%s3 + $0xa8] sm:$0xff]
    %v835 = vld [vmem:[%s3 + $0xb0] sm:$0xff]
    %v836 = vld [vmem:[%s3 + $0xb8] sm:$0xff]
    %v837 = vunpack.c.l.bf16 %v831
    %v838 = vunpack.c.h.bf16 %v831
    %v839 = vunpack.c.l.bf16 %v832
    %v840 = vunpack.c.h.bf16 %v832
    %v841 = vunpack.c.l.bf16 %v833
    %v842 = vunpack.c.h.bf16 %v833
    %v843 = vunpack.c.l.bf16 %v834
    %v844 = vunpack.c.h.bf16 %v834
    %v845 = vunpack.c.l.bf16 %v835
    %v846 = vunpack.c.h.bf16 %v835
    %v847 = vunpack.c.l.bf16 %v836
    %v848 = vunpack.c.h.bf16 %v836
    %v849 = vlaneseq
    %v850 = vshrl.u32 %v849, 7
    %v851 = vsub.s32 1, %v850
    %v852 = vrot.slane %v537, %v851
    %v853 = vlaneseq
    %v854 = vshrl.u32 %v853, 7
    %v855 = vsub.s32 3, %v854
    %v856 = vrot.slane %v537, %v855
    %v857 = vlaneseq
    %v858 = vshrl.u32 %v857, 7
    %v859 = vsub.s32 5, %v858
    %v860 = vrot.slane %v537, %v859
    %v861 = vlaneseq
    %v862 = vshrl.u32 %v861, 7
    %v863 = vsub.s32 7, %v862
    %v864 = vrot.slane %v537, %v863
    %v865 = vlaneseq
    %v866 = vshrl.u32 %v865, 7
    %v867 = vsub.s32 1, %v866
    %v868 = vrot.slane %v538, %v867
    %v869 = vlaneseq
    %v870 = vshrl.u32 %v869, 7
    %v871 = vsub.s32 3, %v870
    %v872 = vrot.slane %v538, %v871
    %v879 = vlaneseq
    %v880 = vshrl.u32 %v879, 7
    %v881 = vsub.s32 1, %v880
    %v882 = vrot.slane %v852, %v881
    %v883 = vlaneseq
    %v884 = vshrl.u32 %v883, 7
    %v885 = vsub.s32 1, %v884
    %v886 = vrot.slane %v856, %v885
    %v887 = vlaneseq
    %v888 = vshrl.u32 %v887, 7
    %v889 = vsub.s32 1, %v888
    %v890 = vrot.slane %v860, %v889
    %v891 = vlaneseq
    %v892 = vshrl.u32 %v891, 7
    %v893 = vsub.s32 1, %v892
    %v894 = vrot.slane %v864, %v893
    %v895 = vlaneseq
    %v896 = vshrl.u32 %v895, 7
    %v897 = vsub.s32 1, %v896
    %v898 = vrot.slane %v868, %v897
    %v899 = vlaneseq
    %v900 = vshrl.u32 %v899, 7
    %v901 = vsub.s32 1, %v900
    %v902 = vrot.slane %v872, %v901
    %v903 = vmul.f32 %v882, %v837
    %v904 = vmul.f32 %v886, %v838
    %v905 = vmul.f32 %v890, %v839
    %v906 = vmul.f32 %v894, %v840
    %v907 = vmul.f32 %v898, %v841
    %v908 = vmul.f32 %v902, %v842
    %v909 = vmul.f32 %v882, %v843
    %v910 = vmul.f32 %v886, %v844
    %v911 = vmul.f32 %v890, %v845
    %v912 = vmul.f32 %v894, %v846
    %v913 = vmul.f32 %v898, %v847
    %v914 = vmul.f32 %v902, %v848
    %v915 = vadd.f32 %v819, %v903
    %v916 = vadd.f32 %v820, %v904
    %v917 = vadd.f32 %v821, %v905
    %v918 = vadd.f32 %v822, %v906
    %v919 = vadd.f32 %v823, %v907
    %v920 = vadd.f32 %v824, %v908
    %v921 = vadd.f32 %v825, %v909
    %v922 = vadd.f32 %v826, %v910
    %v923 = vadd.f32 %v827, %v911
    %v924 = vadd.f32 %v828, %v912
    %v925 = vadd.f32 %v829, %v913
    %v926 = vadd.f32 %v830, %v914
    %v927 = vld [vmem:[%s4] sm:$0xff]
    %v928 = vld [vmem:[%s4 + $0x8] sm:$0xff]
    %v929 = vadd.f32 %v915, %v916
    %v930 = vadd.f32 %v929, %v917
    %v931 = vadd.f32 %v930, %v918
    %v932 = vadd.f32 %v931, %v919
    %v933 = vadd.f32 %v932, %v920
    %934 = vadd.xlane.f32.xlu0 %v933
    %v935 = vpop.xlane.xlu0 %934
    %v936 = vadd.f32 %v921, %v922
    %v937 = vadd.f32 %v936, %v923
    %v938 = vadd.f32 %v937, %v924
    %v939 = vadd.f32 %v938, %v925
    %v940 = vadd.f32 %v939, %v926
    %941 = vadd.xlane.f32.xlu0 %v940
    %v942 = vpop.xlane.xlu0 %941
    %v943 = vadd.f32 %v927, %v935
    %v944 = vadd.f32 %v928, %v942
    %v945 = vxor.u32 %v943, 2147483648
    %v946 = vxor.u32 %v944, 2147483648
    %v947 = vmul.f32 %v945, 1.442695
    %v948 = vpow.pop %v947
    %v949 = vmul.f32 %v946, 1.442695
    %v950 = vpow.pop %v949
    %v951 = vadd.f32 %v948, 1.0
    %v952 = vadd.f32 %v950, 1.0
    %v953 = vrcp.pop %v951
    %v954 = vmul.f32 1.0, %v953
    %v955 = vrcp.pop %v952
    %v956 = vmul.f32 1.0, %v955
    %vm957 = vcmask 7168
    %958 = vst.msk [vmem:[%s5] sm:$0xff] %vm957, %v954
    %959 = vst.msk [vmem:[%s5 + $0x8] sm:$0xff] %vm957, %v956
    // Predicated region
    $region26: #{_select_device.1} parent=1 // pred_check
      _
    $region27: #{_select_device.1} parent=1 // pred_check_branch
      %961 = sbr.rel (0) target = $region29
    $region28: #{_select_device.1} parent=1 // pred_region
      _
    $region29: #{_select_device.1} parent=1 // pred_fallthru
      _
    // Predicated region
    $region30: #{_select_device.1} parent=1 // pred_check
      _
    $region31: #{_select_device.1} parent=1 // pred_check_branch
      %963 = sbr.rel (0) target = $region33
    $region32: #{_select_device.1} parent=1 // pred_region
      _
    $region33: #{_select_device.1} parent=1 // pred_fallthru
      _
    %964 = vsyncpa [#allocation3], 1

</llo_original>
